<compile_context>
chip_gen: v7x
topology: tpu7x:2x2x1
jax: 0.10.0
libtpu: 0.0.40
codegen_flags: <defaults>
</compile_context>

<pallas_src>
import functools
import math

import jax
import jax.numpy as jnp
from jax.experimental import pallas as pl
from jax.experimental.pallas import tpu as pltpu


# ----------------------------- parameter setup (glue) -----------------------------

def _round_up(x, m):
    return ((x + m - 1) // m) * m


def build_window(fft_size, window_fn="hann"):
    n = jnp.arange(fft_size, dtype=jnp.float32)
    if window_fn == "hann":
        # periodic Hann window (matches torch.hann_window(fft_size))
        return 0.5 - 0.5 * jnp.cos(2.0 * math.pi * n / fft_size)
    raise ValueError(f"unsupported window_fn: {window_fn}")


def build_fourier_bases(fft_size, normalize=False):
    k = jnp.arange(fft_size, dtype=jnp.float32)[:, None]
    n = jnp.arange(fft_size, dtype=jnp.float32)[None, :]
    ang = 2.0 * math.pi * k * n / fft_size
    cos_b, sin_b = jnp.cos(ang), jnp.sin(ang)
    if normalize:
        scale = 1.0 / math.sqrt(fft_size)
        cos_b, sin_b = cos_b * scale, sin_b * scale
    return cos_b, sin_b


def make_bases(fft_size, window_fn="hann", normalize=False):
    """Deterministic equivalent of the nn.Parameter `bases` (squeezed): (2*n_bins, fft_size)."""
    n_bins = fft_size // 2 + 1
    window = build_window(fft_size, window_fn)
    cos_b, sin_b = build_fourier_bases(fft_size, normalize)
    cos_b = cos_b[:n_bins] * window
    sin_b = -sin_b[:n_bins] * window
    return jnp.concatenate([cos_b, sin_b], axis=0).astype(jnp.float32)


# ----------------------------- Pallas kernel -----------------------------

def _stft_kernel(xc_ref, xn_ref, b_ref, o_ref, *, n_shifts, f_tile):
    # xc_ref: (1, hop, F_TILE)        waveform rows for this frame tile (hop samples / row)
    # xn_ref: (1, hop, F_TILE)        waveform rows for the NEXT frame tile (overlap spill)
    # b_ref:  (R, C_pad, hop)         windowed Fourier bases, split into hop-sized K chunks
    # o_ref:  (1, C_pad, F_TILE)      lane-dense output tile (channels x frames)
    xcat = jnp.concatenate([xc_ref[0], xn_ref[0]], axis=-1)          # (hop, 2*F_TILE)
    acc = jnp.dot(b_ref[0], xcat[:, 0:f_tile],
                  preferred_element_type=jnp.float32)
    for r in range(1, n_shifts):                                     # R is small (fft/hop, e.g. 2)
        acc = acc + jnp.dot(b_ref[r], xcat[:, r:r + f_tile],
                            preferred_element_type=jnp.float32)
    o_ref[0] = acc


def batch_stft(x, fft_size, hop_size=None, window_fn="hann", normalize=False):
    """x: (batch_size, T) float -> (batch_size, n_bins, n_frames, 2)."""
    if hop_size is None:
        hop_size = fft_size // 2
    x = x.astype(jnp.float32)
    B, T = x.shape
    n_bins = fft_size // 2 + 1

    # Same padding arithmetic as the PyTorch module.
    padding = (hop_size - (T - fft_size) % hop_size) % hop_size + 2 * fft_size
    pad_left = padding // 2
    T_pad = T + padding
    n_frames = (T_pad - fft_size) // hop_size + 1

    # Shifted-matmul decomposition: frame t = sum_r x_rows[t + r] . bases[:, r*hop:(r+1)*hop]
    R = -(-fft_size // hop_size)                 # ceil(fft / hop)
    K_pad = R * hop_size
    C = 2 * n_bins
    C_pad = _round_up(C, 128)                    # lane-dense channel dim (zero-padded)

    if n_frames >= 1024:
        F_TILE = 512
    elif n_frames >= 256:
        F_TILE = 256
    else:
        F_TILE = 128
    assert R <= F_TILE, "hop_size too small relative to fft_size for this kernel"
    F_pad = _round_up(n_frames, F_TILE)
    n_ftiles = F_pad // F_TILE
    n_rows = F_pad + F_TILE                      # +1 tile of rows so the 'next' block is in bounds
    total_len = n_rows * hop_size

    # Pad the waveform (left as the reference; right with zeros out to total_len)
    # and reshape to hop-sized rows with the frame/row axis on lanes.
    x_pad = jnp.pad(x, ((0, 0), (pad_left, total_len - T - pad_left)))
    x_rows_t = jnp.transpose(x_pad.reshape(B, n_rows, hop_size), (0, 2, 1))   # (B, hop, n_rows)

    # Bases: (C, fft) -> zero-pad to (C_pad, K_pad) -> (R, C_pad, hop) chunks.
    bases = make_bases(fft_size, window_fn, normalize)
    bases_pad = jnp.zeros((C_pad, K_pad), jnp.float32).at[:C, :fft_size].set(bases)
    bases_rt = jnp.transpose(bases_pad.reshape(C_pad, R, hop_size), (1, 0, 2))  # (R, C_pad, hop)

    kernel = functools.partial(_stft_kernel, n_shifts=R, f_tile=F_TILE)
    out = pl.pallas_call(
        kernel,
        out_shape=jax.ShapeDtypeStruct((B, C_pad, F_pad), jnp.float32),
        grid_spec=pltpu.PrefetchScalarGridSpec(
            num_scalar_prefetch=0,
            grid=(B, n_ftiles),
            in_specs=[
                pl.BlockSpec((1, hop_size, F_TILE), lambda b, ft: (b, 0, ft)),       # current tile
                pl.BlockSpec((1, hop_size, F_TILE), lambda b, ft: (b, 0, ft + 1)),   # next tile (overlap)
                pl.BlockSpec((R, C_pad, hop_size), lambda b, ft: (0, 0, 0)),         # bases (resident)
            ],
            out_specs=pl.BlockSpec((1, C_pad, F_TILE), lambda b, ft: (b, 0, ft)),
        ),
        compiler_params=pltpu.CompilerParams(
            dimension_semantics=("parallel", "parallel"),
            vmem_limit_bytes=48 * 1024 * 1024,
        ),
    )(x_rows_t, x_rows_t, bases_rt)

    # Epilogue: just slice the zero padding off and pack real/imag (no transposes).
    real = out[:, :n_bins, :n_frames]
    imag = out[:, n_bins:C, :n_frames]
    # TODO(synk): very large fft_size with small hop (bases > ~24 MiB) would need K-tiling of the bases.
    return jnp.stack([real, imag], axis=-1)      # (B, n_bins, n_frames, 2)


# ----------------------------- pure-JAX reference -----------------------------

def batch_stft_reference(x, fft_size, hop_size=None, window_fn="hann", normalize=False):
    if hop_size is None:
        hop_size = fft_size // 2
    x = x.astype(jnp.float32)
    B, T = x.shape
    n_bins = fft_size // 2 + 1
    padding = (hop_size - (T - fft_size) % hop_size) % hop_size + 2 * fft_size
    pad_left = padding // 2
    x_pad = jnp.pad(x, ((0, 0), (pad_left, padding - pad_left)))
    T_pad = T + padding
    n_frames = (T_pad - fft_size) // hop_size + 1
    bases = make_bases(fft_size, window_fn, normalize)      # (2*n_bins, fft_size)
    idx = (jnp.arange(n_frames)[:, None] * hop_size) + jnp.arange(fft_size)[None, :]
    frames = x_pad[:, idx]                                  # (B, n_frames, fft_size)
    out = jnp.einsum("bnf,cf->bcn", frames, bases)          # (B, 2*n_bins, n_frames)
    real, imag = out[:, :n_bins], out[:, n_bins:]
    return jnp.stack([real, imag], axis=-1)                 # (B, n_bins, n_frames, 2)


# ----------------------------- main -----------------------------

if __name__ == "__main__":
    fft_size, hop_size = 16, 8
    batch_size, T = 2, 64

    key = jax.random.PRNGKey(0)
    x = jax.random.normal(key, (batch_size, T), dtype=jnp.float32)

    out = batch_stft(x, fft_size, hop_size)
    out = jax.block_until_ready(out)

    ref = batch_stft_reference(x, fft_size, hop_size)
    expected_frames = (T + 2 * fft_size - fft_size) // hop_size + 1
    assert out.shape == (batch_size, fft_size // 2 + 1, expected_frames, 2), out.shape
    assert jnp.allclose(out, ref, atol=1e-4, rtol=1e-4), float(jnp.max(jnp.abs(out - ref)))

    print("KERNEL_OK")
</pallas_src>

<mosaic_0001>
module attributes {stable_mosaic.version = 11 : i64} {
  func.func @_stft_kernel(%arg0: i32, %arg1: i32, %arg2: memref<1x8x128xf32, #tpu.memory_space<vmem>>, %arg3: memref<1x8x128xf32, #tpu.memory_space<vmem>>, %arg4: memref<2x128x8xf32, #tpu.memory_space<vmem>>, %arg5: memref<1x128x128xf32, #tpu.memory_space<vmem>>) attributes {dimension_semantics = [#tpu.dimension_semantics<parallel>, #tpu.dimension_semantics<parallel>], iteration_bounds = array<i64: 2, 1>, scalar_prefetch = 0 : i64, scratch_operands = 0 : i64, tpu.core_type = #tpu.core_type<tc>, window_params = [{transform_indices = @transform_0, window_bounds = array<i64: 1, 8, 128>}, {transform_indices = @transform_1, window_bounds = array<i64: 1, 8, 128>}, {pipeline_mode = #tpu.pipeline_mode<synchronous>, transform_indices = @transform_2, window_bounds = array<i64: 2, 128, 8>}, {transform_indices = @transform_3, window_bounds = array<i64: 1, 128, 128>}]} {
    %c0 = arith.constant 0 : index
    %c0_0 = arith.constant 0 : index
    %c0_1 = arith.constant 0 : index
    %0 = vector.load %arg2[%c0, %c0_0, %c0_1] : memref<1x8x128xf32, #tpu.memory_space<vmem>>, vector<1x8x128xf32>
    %1 = vector.shape_cast %0 : vector<1x8x128xf32> to vector<8x128xf32>
    %c0_2 = arith.constant 0 : index
    %c0_3 = arith.constant 0 : index
    %c0_4 = arith.constant 0 : index
    %2 = vector.load %arg3[%c0_2, %c0_3, %c0_4] : memref<1x8x128xf32, #tpu.memory_space<vmem>>, vector<1x8x128xf32>
    %3 = vector.shape_cast %2 : vector<1x8x128xf32> to vector<8x128xf32>
    %4 = tpu.concatenate %1, %3 in 1 : vector<8x128xf32>, vector<8x128xf32> -> vector<8x256xf32>
    %c0_5 = arith.constant 0 : index
    %c0_6 = arith.constant 0 : index
    %c0_7 = arith.constant 0 : index
    %5 = vector.load %arg4[%c0_5, %c0_6, %c0_7] : memref<2x128x8xf32, #tpu.memory_space<vmem>>, vector<1x128x8xf32>
    %6 = vector.shape_cast %5 : vector<1x128x8xf32> to vector<128x8xf32>
    %7 = vector.extract_strided_slice %4 {offsets = [0, 0], sizes = [8, 128], strides = [1, 1]} : vector<8x256xf32> to vector<8x128xf32>
    %cst = arith.constant dense<0.000000e+00> : vector<128x128xf32>
    %8 = tpu.matmul %6, %7, %cst {dimension_numbers = #tpu.dot_dimension_numbers<[1], [0], [0], [1], [0, 0, 1, 1], [], []>} : vector<128x8xf32>, vector<8x128xf32>, vector<128x128xf32> -> vector<128x128xf32>
    %c1 = arith.constant 1 : index
    %c0_8 = arith.constant 0 : index
    %c0_9 = arith.constant 0 : index
    %9 = vector.load %arg4[%c1, %c0_8, %c0_9] : memref<2x128x8xf32, #tpu.memory_space<vmem>>, vector<1x128x8xf32>
    %10 = vector.shape_cast %9 : vector<1x128x8xf32> to vector<128x8xf32>
    %11 = vector.extract_strided_slice %4 {offsets = [0, 1], sizes = [8, 128], strides = [1, 1]} : vector<8x256xf32> to vector<8x128xf32>
    %cst_10 = arith.constant dense<0.000000e+00> : vector<128x128xf32>
    %12 = tpu.matmul %10, %11, %cst_10 {dimension_numbers = #tpu.dot_dimension_numbers<[1], [0], [0], [1], [0, 0, 1, 1], [], []>} : vector<128x8xf32>, vector<8x128xf32>, vector<128x128xf32> -> vector<128x128xf32>
    %13 = arith.addf %8, %12 : vector<128x128xf32>
    %c0_11 = arith.constant 0 : index
    %c0_12 = arith.constant 0 : index
    %c0_13 = arith.constant 0 : index
    %14 = vector.load %arg5[%c0_11, %c0_12, %c0_13] : memref<1x128x128xf32, #tpu.memory_space<vmem>>, vector<1x128x128xf32>
    %15 = vector.shape_cast %14 : vector<1x128x128xf32> to vector<128x128xf32>
    %16 = vector.shape_cast %13 : vector<128x128xf32> to vector<1x128x128xf32>
    tpu.vector_store %arg5[%c0_11, %c0_12, %c0_13], %16 {strides = array<i32>} : memref<1x128x128xf32, #tpu.memory_space<vmem>>, vector<1x128x128xf32>,
    return
  }
  func.func @transform_0(%arg0: i32, %arg1: i32) -> (i32, i32, i32) {
    %c0_i32 = arith.constant 0 : i32
    %c0_i32_0 = arith.constant 0 : i32
    return %arg0, %c0_i32, %arg1 : i32, i32, i32
  }
  func.func @transform_1(%arg0: i32, %arg1: i32) -> (i32, i32, i32) {
    %c1_i32 = arith.constant 1 : i32
    %0 = arith.addi %arg1, %c1_i32 : i32
    %c0_i32 = arith.constant 0 : i32
    %c0_i32_0 = arith.constant 0 : i32
    return %arg0, %c0_i32, %0 : i32, i32, i32
  }
  func.func @transform_2(%arg0: i32, %arg1: i32) -> (i32, i32, i32) {
    %c0_i32 = arith.constant 0 : i32
    %c0_i32_0 = arith.constant 0 : i32
    %c0_i32_1 = arith.constant 0 : i32
    %c0_i32_2 = arith.constant 0 : i32
    return %c0_i32, %c0_i32_0, %c0_i32_1 : i32, i32, i32
  }
  func.func @transform_3(%arg0: i32, %arg1: i32) -> (i32, i32, i32) {
    %c0_i32 = arith.constant 0 : i32
    %c0_i32_0 = arith.constant 0 : i32
    return %arg0, %c0_i32, %arg1 : i32, i32, i32
  }
}

</mosaic_0001>

<llo_original>
// kernel: tpu_custom_call.1
$region0: #{tpu_custom_call.1}
  #allocation0 [shape = 'u32[]', space=smem, size = 0x4, offset = 0x4, fixed_abs, tag = 'smem constant byte address 0x4 - core index']
  #allocation1 [shape = 'u32[144,128]{1,0:T(1,128)}', space=vmem, size = 0x12000, scoped, tag = 'internal scratch']
  %s0 = inlined_call_operand.vmem [shape: f32[2,8,256], index: 0, kind: input, shape index: {}]
  %s1 = inlined_call_operand.vmem [shape: f32[2,8,256], index: 1, kind: input, shape index: {}]
  %s2 = inlined_call_operand.vmem [shape: f32[2,128,8], index: 2, kind: input, shape index: {}]
  %s3 = inlined_call_operand.hbm [shape: f32[2,128,128], index: 3, kind: output, shape index: {}]
  %s4 = sld [smem:[#allocation0]]
  $region45: #{tpu_custom_call.1} parent=0
    _
  %s6 = ssub.s32 1, %s4
  %s7 = scalar_select 0, %s6, %s4
  $region1: #{tpu_custom_call.1} parent=0
    #allocation2 [shape = 'u8[131072]{0}', space=vmem, size = 0x20000, scoped, tag = 'output window, operand 0']
    #allocation3 [shape = 's32[2]{0}', space=sflag, size = 0x8, scoped, tag = 'scoped memory for tpu_custom_call.1']
    %8 = vsyncpa [#allocation3], 0
    %s9 = scalar_lea.sflag [#allocation3], 1
    %10 = vsyncpa %s9, 0
    loop: start=0, step=1, limit=4
    $region2: #{tpu_custom_call.1} parent=1 // loop_pre_header
      _
    $region3: #{tpu_custom_call.1} parent=1 // loop_header
      %s12 = sphi 0, %s16
      %p13 = scmp.ge.s32.totalorder %s12, 4
      %s19 = sphi 0, %s31
      %s20 = sphi 0, %s27
      %s21 = sphi 0, %s19
      %s22 = sphi 0, %s20
      %s23 = sphi 0, %s21
      %s24 = sphi 0, %s22
      %s36 = sphi 0, %s38
      %s39 = sphi 0, %s36
      %s40 = sphi 0, %s39
      %s56 = sphi 0, %s40
      %s66 = sphi 0, %s68
      %s69 = sphi 0, %s66
      %s70 = sphi 0, %s69
      %s86 = sphi 0, %s70
      %s90 = sphi 0, %s90
      %s92 = sphi 0, %s90
      %s93 = sphi 0, %s92
      %s107 = sphi 0, %s93
      %s115 = sphi 0, %s117
      %s118 = sphi 0, %s115
      %s119 = sphi 0, %s118
      %s135 = sphi 0, %s119
    $region4: #{tpu_custom_call.1} parent=1 // loop_header_branch
      %15 = sbr.rel (%p13) target = $region8
    $region5: #{tpu_custom_call.1} parent=1 // loop_body
      %s17 = ssub.s32 %s12, 1
      %s18 = ssub.s32 %s12, 2
      %s25 = sadd.s32 1, %s20
      %p26 = scmp.ge.s32.totalorder %s25, 1
      %s27 = scalar_select %p26, 0, %s25
      %s28 = sadd.s32 1, %s19
      %s29 = scalar_select %p26, %s28, %s19
      %p30 = scmp.ge.s32.totalorder %s29, 2
      %s31 = scalar_select %p30, 0, %s29
      %s32 = ssub.s32 %s19, %s31
      %s33 = ssub.s32 %s20, %s27
      %s34 = sor.u32 %s32, %s33
      %p35 = scmp.eq.s32.totalorder %s34, 0
      %s37 = sadd.s32 %s36, 1
      %s38 = scalar_select %p35, %s36, %s37
      %p41 = pneg %p35
      %p42 = scmp.eq.s32.totalorder %s12, 1
      %p43 = por %p41, %p42
      %p44 = scmp.ne.s32.totalorder %s36, %s39
      %p45 = scmp.eq.s32.totalorder %s12, 0
      %p46 = por %p44, %p45
      %p47 = scmp.ne.s32.totalorder %s36, %s39
      %p48 = scmp.eq.s32.totalorder %s17, 1
      %p49 = por %p47, %p48
      %p50 = scmp.ne.s32.totalorder %s39, %s40
      %p51 = scmp.eq.s32.totalorder %s17, 0
      %p52 = por %p50, %p51
      %p53 = scmp.ne.s32.totalorder %s39, %s40
      %p54 = scmp.eq.s32.totalorder %s18, 1
      %p55 = por %p53, %p54
      %p57 = scmp.ne.s32.totalorder %s40, %s56
      %p58 = scmp.eq.s32.totalorder %s18, 0
      %p59 = por %p57, %p58
      %s60 = sadd.s32 %s20, 1
      %s61 = sadd.s32 %s27, 1
      %s62 = ssub.s32 %s19, %s31
      %s63 = ssub.s32 %s60, %s61
      %s64 = sor.u32 %s62, %s63
      %p65 = scmp.eq.s32.totalorder %s64, 0
      %s67 = sadd.s32 %s66, 1
      %s68 = scalar_select %p65, %s66, %s67
      %p71 = pneg %p65
      %p72 = scmp.eq.s32.totalorder %s12, 1
      %p73 = por %p71, %p72
      %p74 = scmp.ne.s32.totalorder %s66, %s69
      %p75 = scmp.eq.s32.totalorder %s12, 0
      %p76 = por %p74, %p75
      %p77 = scmp.ne.s32.totalorder %s66, %s69
      %p78 = scmp.eq.s32.totalorder %s17, 1
      %p79 = por %p77, %p78
      %p80 = scmp.ne.s32.totalorder %s69, %s70
      %p81 = scmp.eq.s32.totalorder %s17, 0
      %p82 = por %p80, %p81
      %p83 = scmp.ne.s32.totalorder %s69, %s70
      %p84 = scmp.eq.s32.totalorder %s18, 1
      %p85 = por %p83, %p84
      %p87 = scmp.ne.s32.totalorder %s70, %s86
      %p88 = scmp.eq.s32.totalorder %s18, 0
      %p89 = por %p87, %p88
      %s91 = sadd.s32 %s90, 1
      %p94 = scmp.eq.s32.totalorder %s12, 1
      %p95 = scmp.ne.s32.totalorder %s90, %s92
      %p96 = scmp.eq.s32.totalorder %s12, 0
      %p97 = por %p95, %p96
      %p98 = scmp.ne.s32.totalorder %s90, %s92
      %p99 = scmp.eq.s32.totalorder %s17, 1
      %p100 = por %p98, %p99
      %p101 = scmp.ne.s32.totalorder %s92, %s93
      %p102 = scmp.eq.s32.totalorder %s17, 0
      %p103 = por %p101, %p102
      %p104 = scmp.ne.s32.totalorder %s92, %s93
      %p105 = scmp.eq.s32.totalorder %s18, 1
      %p106 = por %p104, %p105
      %p108 = scmp.ne.s32.totalorder %s93, %s107
      %p109 = scmp.eq.s32.totalorder %s18, 0
      %p110 = por %p108, %p109
      %s111 = ssub.s32 %s19, %s31
      %s112 = ssub.s32 %s20, %s27
      %s113 = sor.u32 %s111, %s112
      %p114 = scmp.eq.s32.totalorder %s113, 0
      %s116 = sadd.s32 %s115, 1
      %s117 = scalar_select %p114, %s115, %s116
      %p120 = pneg %p114
      %p121 = scmp.eq.s32.totalorder %s12, 1
      %p122 = por %p120, %p121
      %p123 = scmp.ne.s32.totalorder %s115, %s118
      %p124 = scmp.eq.s32.totalorder %s12, 0
      %p125 = por %p123, %p124
      %p126 = scmp.ne.s32.totalorder %s115, %s118
      %p127 = scmp.eq.s32.totalorder %s17, 1
      %p128 = por %p126, %p127
      %p129 = scmp.ne.s32.totalorder %s118, %s119
      %p130 = scmp.eq.s32.totalorder %s17, 0
      %p131 = por %p129, %p130
      %p132 = scmp.ne.s32.totalorder %s118, %s119
      %p133 = scmp.eq.s32.totalorder %s18, 1
      %p134 = por %p132, %p133
      %p136 = scmp.ne.s32.totalorder %s119, %s135
      %p137 = scmp.eq.s32.totalorder %s18, 0
      %p138 = por %p136, %p137
      %p139 = scmp.le.s32.totalorder 1, %s12
      %p140 = scmp.lt.s32.totalorder %s12, 3
      %p141 = pnand %p139, %p140
      %p142 = pneg %p141
      // Predicated region
      $region9: #{tpu_custom_call.1} parent=5 // pred_check
        _
      $region10: #{tpu_custom_call.1} parent=5 // pred_check_branch
        %144 = sbr.rel (%p141) target = $region12
      $region11: #{tpu_custom_call.1} parent=5 // pred_region
        %s145 = ssub.s32 %s12, 1
        // Predicated region
        $region13: #{tpu_custom_call.1} parent=11 // pred_check
          %p146 = pneg %p103
        $region14: #{tpu_custom_call.1} parent=11 // pred_check_branch
          %148 = sbr.rel (%p146) target = $region16
        $region15: #{tpu_custom_call.1} parent=11 // pred_region
          _
        $region16: #{tpu_custom_call.1} parent=11 // pred_fallthru
          _
      $region12: #{tpu_custom_call.1} parent=5 // pred_fallthru
        _
      %p149 = scmp.lt.s32.totalorder %s12, 2
      // Predicated region
      $region17: #{tpu_custom_call.1} parent=5 // pred_check
        %p150 = pneg %p149
      $region18: #{tpu_custom_call.1} parent=5 // pred_check_branch
        %152 = sbr.rel (%p150) target = $region20
      $region19: #{tpu_custom_call.1} parent=5 // pred_region
        // Predicated region
        $region21: #{tpu_custom_call.1} parent=19 // pred_check
          %p153 = pneg %p46
        $region22: #{tpu_custom_call.1} parent=19 // pred_check_branch
          %155 = sbr.rel (%p153) target = $region24
        $region23: #{tpu_custom_call.1} parent=19 // pred_region
          %p156 = scmp.lt.s32.totalorder %s19, 1
          %s157 = scalar_select %p156, %s19, 1
          %p158 = scmp.lt.s32.totalorder %s20, 1
          %s159 = scalar_select %p158, %s20, 1
          %s160 = smul.addr %s157, 2
          %s161 = sadd.s32 %s159, %s160
          %s162 = smul.addr %s161, 8
          %s163 = scalar_lea.vmem %s0, %s162
        $region24: #{tpu_custom_call.1} parent=19 // pred_fallthru
          _
        // Predicated region
        $region25: #{tpu_custom_call.1} parent=19 // pred_check
          %p164 = pneg %p76
        $region26: #{tpu_custom_call.1} parent=19 // pred_check_branch
          %166 = sbr.rel (%p164) target = $region28
        $region27: #{tpu_custom_call.1} parent=19 // pred_region
          %s167 = sadd.s32 %s20, 1
          %p168 = scmp.lt.s32.totalorder %s19, 1
          %s169 = scalar_select %p168, %s19, 1
          %p170 = scmp.lt.s32.totalorder %s167, 1
          %s171 = scalar_select %p170, %s167, 1
          %s172 = smul.addr %s169, 2
          %s173 = sadd.s32 %s171, %s172
          %s174 = smul.addr %s173, 8
          %s175 = scalar_lea.vmem %s1, %s174
          %s176 = sadd.s32 %s20, 1
        $region28: #{tpu_custom_call.1} parent=19 // pred_fallthru
          _
      $region20: #{tpu_custom_call.1} parent=5 // pred_fallthru
        _
      %p177 = scmp.le.s32.totalorder 1, %s12
      %p178 = scmp.lt.s32.totalorder %s12, 3
      %p179 = pnand %p177, %p178
      %p180 = pneg %p179
      // Predicated region
      $region29: #{tpu_custom_call.1} parent=5 // pred_check
        _
      $region30: #{tpu_custom_call.1} parent=5 // pred_check_branch
        %182 = sbr.rel (%p179) target = $region32
      $region31: #{tpu_custom_call.1} parent=5 // pred_region
        %s183 = ssub.s32 %s12, 1
        %p184 = scmp.lt.s32.totalorder %s21, 1
        %s185 = scalar_select %p184, %s21, 1
        %p186 = scmp.lt.s32.totalorder %s22, 1
        %s187 = scalar_select %p186, %s22, 1
        %s188 = smul.addr %s185, 2
        %s189 = sadd.s32 %s187, %s188
        %s190 = smul.addr %s189, 8
        %s191 = scalar_lea.vmem %s0, %s190
        %p192 = pneg %p52
        %p193 = pneg %p49
        %s194 = sadd.s32 %s22, 1
        %p195 = scmp.lt.s32.totalorder %s21, 1
        %s196 = scalar_select %p195, %s21, 1
        %p197 = scmp.lt.s32.totalorder %s194, 1
        %s198 = scalar_select %p197, %s194, 1
        %s199 = smul.addr %s196, 2
        %s200 = sadd.s32 %s198, %s199
        %s201 = smul.addr %s200, 8
        %s202 = scalar_lea.vmem %s1, %s201
        %p203 = pneg %p82
        %p204 = pneg %p79
        %p205 = pneg %p103
        %p206 = pneg %p100
        %p207 = pneg %p131
        %p208 = pneg %p128
        %s209 = sand.u32 %s118, 1
        %s210 = scalar_lea.sflag [#allocation3], %s209
        %s211 = sand.u32 %s118, 1
        %s212 = smul.addr %s211, 128
        %s213 = scalar_lea.vmem [#allocation2], %s212
        %p214 = scmp.lt.s32.totalorder %s21, 1
        %s215 = scalar_select %p214, %s21, 1
        %p216 = scmp.lt.s32.totalorder %s22, 1
        %s217 = scalar_select %p216, %s22, 1
        %s218 = smul.addr %s215, 2
        %s219 = sadd.s32 %s217, %s218
        %s220 = smul.addr %s219, 8
        %s221 = scalar_lea.vmem %s0, %s220
        %s222 = sadd.s32 %s22, 1
        %p223 = scmp.lt.s32.totalorder %s21, 1
        %s224 = scalar_select %p223, %s21, 1
        %p225 = scmp.lt.s32.totalorder %s222, 1
        %s226 = scalar_select %p225, %s222, 1
        %s227 = smul.addr %s224, 2
        %s228 = sadd.s32 %s226, %s227
        %s229 = smul.addr %s228, 8
        %s230 = scalar_lea.vmem %s1, %s229
        %s231 = sadd.s32 %s22, 1
        %v232 = vld [vmem:[%s221] sm:$0xff]
        %v233 = vld [vmem:[%s230] sm:$0xff]
        %v234 = vld [vmem:[%s2] sm:$0xff]
        %v235 = vld [vmem:[%s2 + $0x8] sm:$0xff]
        %v236 = vld [vmem:[%s2 + $0x10] sm:$0xff]
        %v237 = vld [vmem:[%s2 + $0x18] sm:$0xff]
        %v238 = vld [vmem:[%s2 + $0x20] sm:$0xff]
        %v239 = vld [vmem:[%s2 + $0x28] sm:$0xff]
        %v240 = vld [vmem:[%s2 + $0x30] sm:$0xff]
        %v241 = vld [vmem:[%s2 + $0x38] sm:$0xff]
        %v242 = vld [vmem:[%s2 + $0x40] sm:$0xff]
        %v243 = vld [vmem:[%s2 + $0x48] sm:$0xff]
        %v244 = vld [vmem:[%s2 + $0x50] sm:$0xff]
        %v245 = vld [vmem:[%s2 + $0x58] sm:$0xff]
        %v246 = vld [vmem:[%s2 + $0x60] sm:$0xff]
        %v247 = vld [vmem:[%s2 + $0x68] sm:$0xff]
        %v248 = vld [vmem:[%s2 + $0x70] sm:$0xff]
        %v249 = vld [vmem:[%s2 + $0x78] sm:$0xff]
        %s250 = scalar_lea.vmem %s2, 128
        %v251 = vld [vmem:[%s250] sm:$0xff]
        %v252 = vld [vmem:[%s250 + $0x8] sm:$0xff]
        %v253 = vld [vmem:[%s250 + $0x10] sm:$0xff]
        %v254 = vld [vmem:[%s250 + $0x18] sm:$0xff]
        %v255 = vld [vmem:[%s250 + $0x20] sm:$0xff]
        %v256 = vld [vmem:[%s250 + $0x28] sm:$0xff]
        %v257 = vld [vmem:[%s250 + $0x30] sm:$0xff]
        %v258 = vld [vmem:[%s250 + $0x38] sm:$0xff]
        %v259 = vld [vmem:[%s250 + $0x40] sm:$0xff]
        %v260 = vld [vmem:[%s250 + $0x48] sm:$0xff]
        %v261 = vld [vmem:[%s250 + $0x50] sm:$0xff]
        %v262 = vld [vmem:[%s250 + $0x58] sm:$0xff]
        %v263 = vld [vmem:[%s250 + $0x60] sm:$0xff]
        %v264 = vld [vmem:[%s250 + $0x68] sm:$0xff]
        %v265 = vld [vmem:[%s250 + $0x70] sm:$0xff]
        %v266 = vld [vmem:[%s250 + $0x78] sm:$0xff]
        %269 = vrot.lane.b32.xlu0 %v232, 127
        %v270 = vpop.permute.xlu0 %269
        %271 = vrot.lane.b32.xlu0 %v233, 127
        %v272 = vpop.permute.xlu0 %271
        %vm273 = vcmask 1039360
        %v274 = vsel %vm273, %v270, %v272
        %vm276 = vcmask 64512
        %v278 = vsel %vm276, %v251, 0
        %v281 = vsel %vm276, %v252, 0
        %v284 = vsel %vm276, %v253, 0
        %v287 = vsel %vm276, %v254, 0
        %v290 = vsel %vm276, %v255, 0
        %v293 = vsel %vm276, %v256, 0
        %v296 = vsel %vm276, %v257, 0
        %v299 = vsel %vm276, %v258, 0
        %v302 = vsel %vm276, %v259, 0
        %v305 = vsel %vm276, %v260, 0
        %v308 = vsel %vm276, %v261, 0
        %v311 = vsel %vm276, %v262, 0
        %v314 = vsel %vm276, %v263, 0
        %v317 = vsel %vm276, %v264, 0
        %v320 = vsel %vm276, %v265, 0
        %v323 = vsel %vm276, %v266, 0
        %325 = vmatprep.subr.mxu0 0.0
        %326 = vmatpush1.msra.mxu0 %v274
        %327 = vmatprep.subr.mxu0 0.0
        %328 = vmatpush1.msra.mxu0 0.0
        %329 = vmatprep.subr.mxu0 0.0
        %330 = vmatpush1.msra.mxu0 0.0
        %331 = vmatprep.subr.mxu0 0.0
        %332 = vmatpush1.msra.mxu0 0.0
        %333 = vmatprep.subr.mxu0 0.0
        %334 = vmatpush1.msra.mxu0 0.0
        %335 = vmatprep.subr.mxu0 0.0
        %336 = vmatpush1.msra.mxu0 0.0
        %337 = vmatprep.subr.mxu0 0.0
        %338 = vmatpush1.msra.mxu0 0.0
        %339 = vmatprep.subr.mxu0 0.0
        %340 = vmatpush1.msra.mxu0 0.0
        %341 = vmatprep.subr.mxu0 0.0
        %342 = vmatpush1.msra.mxu0 0.0
        %343 = vmatprep.subr.mxu0 0.0
        %344 = vmatpush1.msra.mxu0 0.0
        %345 = vmatprep.subr.mxu0 0.0
        %346 = vmatpush1.msra.mxu0 0.0
        %347 = vmatprep.subr.mxu0 0.0
        %348 = vmatpush1.msra.mxu0 0.0
        %349 = vmatprep.subr.mxu0 0.0
        %350 = vmatpush1.msra.mxu0 0.0
        %351 = vmatprep.subr.mxu0 0.0
        %352 = vmatpush1.msra.mxu0 0.0
        %353 = vmatprep.subr.mxu0 0.0
        %354 = vmatpush1.msra.mxu0 0.0
        %355 = vmatprep.subr.mxu0 0.0
        %356 = vmatpush1.msra.mxu0 0.0
        %357 = vmatprep.subr.mxu0 0.0
        %358 = vmatpush1.msra.mxu0 0.0
        %359 = vmatprep.subr.mxu0 0.0
        %360 = vmatpush1.msra.mxu0 0.0
        %361 = vmatprep.subr.mxu0 0.0
        %362 = vmatpush1.msra.mxu0 0.0
        %363 = vmatprep.subr.mxu0 0.0
        %364 = vmatpush1.msra.mxu0 0.0
        %365 = vmatprep.subr.mxu0 0.0
        %366 = vmatpush1.msra.mxu0 0.0
        %367 = vmatprep.subr.mxu0 0.0
        %368 = vmatpush1.msra.mxu0 0.0
        %369 = vmatprep.subr.mxu0 0.0
        %370 = vmatpush1.msra.mxu0 0.0
        %371 = vmatprep.subr.mxu0 0.0
        %372 = vmatpush1.msra.mxu0 0.0
        %373 = vmatprep.subr.mxu0 0.0
        %374 = vmatpush1.msra.mxu0 0.0
        %375 = vmatprep.subr.mxu0 0.0
        %376 = vmatpush1.msra.mxu0 0.0
        %377 = vmatprep.subr.mxu0 0.0
        %378 = vmatpush1.msra.mxu0 0.0
        %379 = vmatprep.subr.mxu0 0.0
        %380 = vmatpush1.msra.mxu0 0.0
        %381 = vmatprep.subr.mxu0 0.0
        %382 = vmatpush1.msra.mxu0 0.0
        %383 = vmatprep.subr.mxu0 0.0
        %384 = vmatpush1.msra.mxu0 0.0
        %385 = vmatprep.subr.mxu0 0.0
        %386 = vmatpush1.msra.mxu0 0.0
        %387 = vmatprep.subr.mxu0 0.0
        %388 = vmatpush1.msra.mxu0 0.0
        %389 = vmatprep.mubr.f32.mxu0 0.0
        %390 = vmatmul.mubr.f32.gmra.mrb[0].mxu0 %v278
        %v391 = vpop.f32.mrb[0].mxu0
        %v392 = vadd.f32 0.0, %v391
        %v393 = vpop.f32.mrb[0].mxu0
        %394 = vmatprep.mubr.f32.mxu0 0.0
        %395 = vmatmul.mubr.f32.gmra.mrb[0].mxu0 %v281
        %v396 = vpop.f32.mrb[0].mxu0
        %v397 = vadd.f32 0.0, %v396
        %v398 = vpop.f32.mrb[0].mxu0
        %399 = vmatprep.mubr.f32.mxu0 0.0
        %400 = vmatmul.mubr.f32.gmra.mrb[0].mxu0 %v284
        %v401 = vpop.f32.mrb[0].mxu0
        %v402 = vadd.f32 0.0, %v401
        %v403 = vpop.f32.mrb[0].mxu0
        %404 = vmatprep.mubr.f32.mxu0 0.0
        %405 = vmatmul.mubr.f32.gmra.mrb[0].mxu0 %v287
        %v406 = vpop.f32.mrb[0].mxu0
        %v407 = vadd.f32 0.0, %v406
        %v408 = vpop.f32.mrb[0].mxu0
        %409 = vmatprep.mubr.f32.mxu0 0.0
        %410 = vmatmul.mubr.f32.gmra.mrb[0].mxu0 %v290
        %v411 = vpop.f32.mrb[0].mxu0
        %v412 = vadd.f32 0.0, %v411
        %v413 = vpop.f32.mrb[0].mxu0
        %414 = vmatprep.mubr.f32.mxu0 0.0
        %415 = vmatmul.mubr.f32.gmra.mrb[0].mxu0 %v293
        %v416 = vpop.f32.mrb[0].mxu0
        %v417 = vadd.f32 0.0, %v416
        %v418 = vpop.f32.mrb[0].mxu0
        %419 = vmatprep.mubr.f32.mxu0 0.0
        %420 = vmatmul.mubr.f32.gmra.mrb[0].mxu0 %v296
        %v421 = vpop.f32.mrb[0].mxu0
        %v422 = vadd.f32 0.0, %v421
        %v423 = vpop.f32.mrb[0].mxu0
        %424 = vmatprep.mubr.f32.mxu0 0.0
        %425 = vmatmul.mubr.f32.gmra.mrb[0].mxu0 %v299
        %v426 = vpop.f32.mrb[0].mxu0
        %v427 = vadd.f32 0.0, %v426
        %v428 = vpop.f32.mrb[0].mxu0
        %429 = vmatprep.mubr.f32.mxu0 0.0
        %430 = vmatmul.mubr.f32.gmra.mrb[0].mxu0 %v302
        %v431 = vpop.f32.mrb[0].mxu0
        %v432 = vadd.f32 0.0, %v431
        %v433 = vpop.f32.mrb[0].mxu0
        %434 = vmatprep.mubr.f32.mxu0 0.0
        %435 = vmatmul.mubr.f32.gmra.mrb[0].mxu0 %v305
        %v436 = vpop.f32.mrb[0].mxu0
        %v437 = vadd.f32 0.0, %v436
        %v438 = vpop.f32.mrb[0].mxu0
        %439 = vmatprep.mubr.f32.mxu0 0.0
        %440 = vmatmul.mubr.f32.gmra.mrb[0].mxu0 %v308
        %v441 = vpop.f32.mrb[0].mxu0
        %v442 = vadd.f32 0.0, %v441
        %v443 = vpop.f32.mrb[0].mxu0
        %444 = vmatprep.mubr.f32.mxu0 0.0
        %445 = vmatmul.mubr.f32.gmra.mrb[0].mxu0 %v311
        %v446 = vpop.f32.mrb[0].mxu0
        %v447 = vadd.f32 0.0, %v446
        %v448 = vpop.f32.mrb[0].mxu0
        %449 = vmatprep.mubr.f32.mxu0 0.0
        %450 = vmatmul.mubr.f32.gmra.mrb[0].mxu0 %v314
        %v451 = vpop.f32.mrb[0].mxu0
        %v452 = vadd.f32 0.0, %v451
        %v453 = vpop.f32.mrb[0].mxu0
        %454 = vmatprep.mubr.f32.mxu0 0.0
        %455 = vmatmul.mubr.f32.gmra.mrb[0].mxu0 %v317
        %v456 = vpop.f32.mrb[0].mxu0
        %v457 = vadd.f32 0.0, %v456
        %v458 = vpop.f32.mrb[0].mxu0
        %459 = vmatprep.mubr.f32.mxu0 0.0
        %460 = vmatmul.mubr.f32.gmra.mrb[0].mxu0 %v320
        %v461 = vpop.f32.mrb[0].mxu0
        %v462 = vadd.f32 0.0, %v461
        %v463 = vpop.f32.mrb[0].mxu0
        %464 = vmatprep.mubr.f32.mxu0 0.0
        %465 = vmatmul.mubr.f32.gmra.mrb[0].mxu0 %v323
        %v466 = vpop.f32.mrb[0].mxu0
        %v467 = vadd.f32 0.0, %v466
        %v468 = vpop.f32.mrb[0].mxu0
        %469 = vdwg.mxu0
        %v471 = vsel %vm276, %v234, 0
        %v474 = vsel %vm276, %v235, 0
        %v477 = vsel %vm276, %v236, 0
        %v480 = vsel %vm276, %v237, 0
        %v483 = vsel %vm276, %v238, 0
        %v486 = vsel %vm276, %v239, 0
        %v489 = vsel %vm276, %v240, 0
        %v492 = vsel %vm276, %v241, 0
        %v495 = vsel %vm276, %v242, 0
        %v498 = vsel %vm276, %v243, 0
        %v501 = vsel %vm276, %v244, 0
        %v504 = vsel %vm276, %v245, 0
        %v507 = vsel %vm276, %v246, 0
        %v510 = vsel %vm276, %v247, 0
        %v513 = vsel %vm276, %v248, 0
        %v516 = vsel %vm276, %v249, 0
        %518 = vmatprep.subr.mxu0 0.0
        %519 = vmatpush1.msra.mxu0 %v232
        %520 = vmatprep.subr.mxu0 0.0
        %521 = vmatpush1.msra.mxu0 0.0
        %522 = vmatprep.subr.mxu0 0.0
        %523 = vmatpush1.msra.mxu0 0.0
        %524 = vmatprep.subr.mxu0 0.0
        %525 = vmatpush1.msra.mxu0 0.0
        %526 = vmatprep.subr.mxu0 0.0
        %527 = vmatpush1.msra.mxu0 0.0
        %528 = vmatprep.subr.mxu0 0.0
        %529 = vmatpush1.msra.mxu0 0.0
        %530 = vmatprep.subr.mxu0 0.0
        %531 = vmatpush1.msra.mxu0 0.0
        %532 = vmatprep.subr.mxu0 0.0
        %533 = vmatpush1.msra.mxu0 0.0
        %534 = vmatprep.subr.mxu0 0.0
        %535 = vmatpush1.msra.mxu0 0.0
        %536 = vmatprep.subr.mxu0 0.0
        %537 = vmatpush1.msra.mxu0 0.0
        %538 = vmatprep.subr.mxu0 0.0
        %539 = vmatpush1.msra.mxu0 0.0
        %540 = vmatprep.subr.mxu0 0.0
        %541 = vmatpush1.msra.mxu0 0.0
        %542 = vmatprep.subr.mxu0 0.0
        %543 = vmatpush1.msra.mxu0 0.0
        %544 = vmatprep.subr.mxu0 0.0
        %545 = vmatpush1.msra.mxu0 0.0
        %546 = vmatprep.subr.mxu0 0.0
        %547 = vmatpush1.msra.mxu0 0.0
        %548 = vmatprep.subr.mxu0 0.0
        %549 = vmatpush1.msra.mxu0 0.0
        %550 = vmatprep.subr.mxu0 0.0
        %551 = vmatpush1.msra.mxu0 0.0
        %552 = vmatprep.subr.mxu0 0.0
        %553 = vmatpush1.msra.mxu0 0.0
        %554 = vmatprep.subr.mxu0 0.0
        %555 = vmatpush1.msra.mxu0 0.0
        %556 = vmatprep.subr.mxu0 0.0
        %557 = vmatpush1.msra.mxu0 0.0
        %558 = vmatprep.subr.mxu0 0.0
        %559 = vmatpush1.msra.mxu0 0.0
        %560 = vmatprep.subr.mxu0 0.0
        %561 = vmatpush1.msra.mxu0 0.0
        %562 = vmatprep.subr.mxu0 0.0
        %563 = vmatpush1.msra.mxu0 0.0
        %564 = vmatprep.subr.mxu0 0.0
        %565 = vmatpush1.msra.mxu0 0.0
        %566 = vmatprep.subr.mxu0 0.0
        %567 = vmatpush1.msra.mxu0 0.0
        %568 = vmatprep.subr.mxu0 0.0
        %569 = vmatpush1.msra.mxu0 0.0
        %570 = vmatprep.subr.mxu0 0.0
        %571 = vmatpush1.msra.mxu0 0.0
        %572 = vmatprep.subr.mxu0 0.0
        %573 = vmatpush1.msra.mxu0 0.0
        %574 = vmatprep.subr.mxu0 0.0
        %575 = vmatpush1.msra.mxu0 0.0
        %576 = vmatprep.subr.mxu0 0.0
        %577 = vmatpush1.msra.mxu0 0.0
        %578 = vmatprep.subr.mxu0 0.0
        %579 = vmatpush1.msra.mxu0 0.0
        %580 = vmatprep.subr.mxu0 0.0
        %581 = vmatpush1.msra.mxu0 0.0
        %582 = vmatprep.mubr.f32.mxu0 0.0
        %583 = vmatmul.mubr.f32.gmra.mrb[0].mxu0 %v471
        %v584 = vpop.f32.mrb[0].mxu0
        %v585 = vadd.f32 %v392, %v584
        %v586 = vpop.f32.mrb[0].mxu0
        %587 = vmatprep.mubr.f32.mxu0 0.0
        %588 = vmatmul.mubr.f32.gmra.mrb[0].mxu0 %v474
        %v589 = vpop.f32.mrb[0].mxu0
        %v590 = vadd.f32 %v397, %v589
        %v591 = vpop.f32.mrb[0].mxu0
        %592 = vmatprep.mubr.f32.mxu0 0.0
        %593 = vmatmul.mubr.f32.gmra.mrb[0].mxu0 %v477
        %v594 = vpop.f32.mrb[0].mxu0
        %v595 = vadd.f32 %v402, %v594
        %v596 = vpop.f32.mrb[0].mxu0
        %597 = vmatprep.mubr.f32.mxu0 0.0
        %598 = vmatmul.mubr.f32.gmra.mrb[0].mxu0 %v480
        %v599 = vpop.f32.mrb[0].mxu0
        %v600 = vadd.f32 %v407, %v599
        %v601 = vpop.f32.mrb[0].mxu0
        %602 = vmatprep.mubr.f32.mxu0 0.0
        %603 = vmatmul.mubr.f32.gmra.mrb[0].mxu0 %v483
        %v604 = vpop.f32.mrb[0].mxu0
        %v605 = vadd.f32 %v412, %v604
        %v606 = vpop.f32.mrb[0].mxu0
        %607 = vmatprep.mubr.f32.mxu0 0.0
        %608 = vmatmul.mubr.f32.gmra.mrb[0].mxu0 %v486
        %v609 = vpop.f32.mrb[0].mxu0
        %v610 = vadd.f32 %v417, %v609
        %v611 = vpop.f32.mrb[0].mxu0
        %612 = vmatprep.mubr.f32.mxu0 0.0
        %613 = vmatmul.mubr.f32.gmra.mrb[0].mxu0 %v489
        %v614 = vpop.f32.mrb[0].mxu0
        %v615 = vadd.f32 %v422, %v614
        %v616 = vpop.f32.mrb[0].mxu0
        %617 = vmatprep.mubr.f32.mxu0 0.0
        %618 = vmatmul.mubr.f32.gmra.mrb[0].mxu0 %v492
        %v619 = vpop.f32.mrb[0].mxu0
        %v620 = vadd.f32 %v427, %v619
        %v621 = vpop.f32.mrb[0].mxu0
        %622 = vmatprep.mubr.f32.mxu0 0.0
        %623 = vmatmul.mubr.f32.gmra.mrb[0].mxu0 %v495
        %v624 = vpop.f32.mrb[0].mxu0
        %v625 = vadd.f32 %v432, %v624
        %v626 = vpop.f32.mrb[0].mxu0
        %627 = vmatprep.mubr.f32.mxu0 0.0
        %628 = vmatmul.mubr.f32.gmra.mrb[0].mxu0 %v498
        %v629 = vpop.f32.mrb[0].mxu0
        %v630 = vadd.f32 %v437, %v629
        %v631 = vpop.f32.mrb[0].mxu0
        %632 = vmatprep.mubr.f32.mxu0 0.0
        %633 = vmatmul.mubr.f32.gmra.mrb[0].mxu0 %v501
        %v634 = vpop.f32.mrb[0].mxu0
        %v635 = vadd.f32 %v442, %v634
        %v636 = vpop.f32.mrb[0].mxu0
        %637 = vmatprep.mubr.f32.mxu0 0.0
        %638 = vmatmul.mubr.f32.gmra.mrb[0].mxu0 %v504
        %v639 = vpop.f32.mrb[0].mxu0
        %v640 = vadd.f32 %v447, %v639
        %v641 = vpop.f32.mrb[0].mxu0
        %642 = vmatprep.mubr.f32.mxu0 0.0
        %643 = vmatmul.mubr.f32.gmra.mrb[0].mxu0 %v507
        %v644 = vpop.f32.mrb[0].mxu0
        %v645 = vadd.f32 %v452, %v644
        %v646 = vpop.f32.mrb[0].mxu0
        %647 = vmatprep.mubr.f32.mxu0 0.0
        %648 = vmatmul.mubr.f32.gmra.mrb[0].mxu0 %v510
        %v649 = vpop.f32.mrb[0].mxu0
        %v650 = vadd.f32 %v457, %v649
        %v651 = vpop.f32.mrb[0].mxu0
        %652 = vmatprep.mubr.f32.mxu0 0.0
        %653 = vmatmul.mubr.f32.gmra.mrb[0].mxu0 %v513
        %v654 = vpop.f32.mrb[0].mxu0
        %v655 = vadd.f32 %v462, %v654
        %v656 = vpop.f32.mrb[0].mxu0
        %657 = vmatprep.mubr.f32.mxu0 0.0
        %658 = vmatmul.mubr.f32.gmra.mrb[0].mxu0 %v516
        %v659 = vpop.f32.mrb[0].mxu0
        %v660 = vadd.f32 %v467, %v659
        %v661 = vpop.f32.mrb[0].mxu0
        %662 = vdwg.mxu0
        %663 = vst [vmem:[%s213] sm:$0xff] %v585
        %664 = vst [vmem:[%s213 + $0x8] sm:$0xff] %v590
        %665 = vst [vmem:[%s213 + $0x10] sm:$0xff] %v595
        %666 = vst [vmem:[%s213 + $0x18] sm:$0xff] %v600
        %667 = vst [vmem:[%s213 + $0x20] sm:$0xff] %v605
        %668 = vst [vmem:[%s213 + $0x28] sm:$0xff] %v610
        %669 = vst [vmem:[%s213 + $0x30] sm:$0xff] %v615
        %670 = vst [vmem:[%s213 + $0x38] sm:$0xff] %v620
        %671 = vst [vmem:[%s213 + $0x40] sm:$0xff] %v625
        %672 = vst [vmem:[%s213 + $0x48] sm:$0xff] %v630
        %673 = vst [vmem:[%s213 + $0x50] sm:$0xff] %v635
        %674 = vst [vmem:[%s213 + $0x58] sm:$0xff] %v640
        %675 = vst [vmem:[%s213 + $0x60] sm:$0xff] %v645
        %676 = vst [vmem:[%s213 + $0x68] sm:$0xff] %v650
        %677 = vst [vmem:[%s213 + $0x70] sm:$0xff] %v655
        %678 = vst [vmem:[%s213 + $0x78] sm:$0xff] %v660
        %s679 = sand.u32 %s118, 1
        %s680 = scalar_lea.sflag [#allocation3], %s679
        %s681 = sand.u32 %s118, 1
        %s682 = smul.addr %s681, 128
        %s683 = scalar_lea.vmem [#allocation2], %s682
        // Predicated region
        $region33: #{tpu_custom_call.1} parent=31 // pred_check
          %p684 = pneg %p128
        $region34: #{tpu_custom_call.1} parent=31 // pred_check_branch
          %686 = sbr.rel (%p684) target = $region36
        $region35: #{tpu_custom_call.1} parent=31 // pred_region
          %s688 = ssub.s32 2048, 2048
          %689 = vsyncadd %s680, %s688
          %s690 = smul.addr %s21, 16
          %s691 = sadd.s32 %s22, %s690
          %s692 = smul.addr %s691, 128
          %s693 = scalar_lea.hbm %s3, %s692
          %s694 = sshll.u32 %s683, 4
          %s695 = int_to_ptr.vmem [resolvable:$true] %s694
          %700 = dma.vmem_to_hbm [thread:$0]  %s695, 2048, %s693, %s680, 128, 128, 8
        $region36: #{tpu_custom_call.1} parent=31 // pred_fallthru
          _
      $region32: #{tpu_custom_call.1} parent=5 // pred_fallthru
        _
      %p701 = scmp.le.s32.totalorder 2, %s12
      // Predicated region
      $region37: #{tpu_custom_call.1} parent=5 // pred_check
        %p702 = pneg %p701
      $region38: #{tpu_custom_call.1} parent=5 // pred_check_branch
        %704 = sbr.rel (%p702) target = $region40
      $region39: #{tpu_custom_call.1} parent=5 // pred_region
        %s705 = ssub.s32 %s12, 2
        // Predicated region
        $region41: #{tpu_custom_call.1} parent=39 // pred_check
          %p706 = pneg %p134
        $region42: #{tpu_custom_call.1} parent=39 // pred_check_branch
          %708 = sbr.rel (%p706) target = $region44
        $region43: #{tpu_custom_call.1} parent=39 // pred_region
          %s709 = sand.u32 %s119, 1
          %s710 = scalar_lea.sflag [#allocation3], %s709
          %s711 = sand.u32 %s119, 1
          %s712 = smul.addr %s711, 128
          %s713 = scalar_lea.vmem [#allocation2], %s712
          %714 = dma.done %s710, 2048
        $region44: #{tpu_custom_call.1} parent=39 // pred_fallthru
          _
      $region40: #{tpu_custom_call.1} parent=5 // pred_fallthru
        _
    $region6: #{tpu_custom_call.1} parent=1 // loop_footer
      %s16 = sadd.s32 1, %s12
    $region7: #{tpu_custom_call.1} parent=1 // loop_footer_branch
      %11 = sbr.rel target = $region3
    $region8: #{tpu_custom_call.1} parent=1 // loop_exit
      _
    %715 = vsyncpa [#allocation3], 1
    %s716 = scalar_lea.sflag [#allocation3], 1
    %717 = vsyncpa %s716, 1

</llo_original>
